<compile_context>
chip_gen: v7x
topology: tpu7x:2x2x1
jax: 0.10.0
libtpu: 0.0.40
codegen_flags: <defaults>
</compile_context>

<pallas_src>
import functools
import math

import jax
import jax.numpy as jnp
from jax.experimental import pallas as pl
from jax.experimental.pallas import tpu as pltpu


def _round_up(x, m):
    return ((x + m - 1) // m) * m


def _cdiv(a, b):
    return (a + b - 1) // b


@functools.lru_cache(maxsize=None)
def _device_vmem_budget_bytes():
    """Physical VMEM minus ~8 MiB headroom; conservative 64 MiB (v7x) fallback."""
    cap = 64 << 20
    try:
        cap = int(pltpu.get_tpu_info().vmem_capacity_bytes)
    except Exception:
        pass
    return max(cap - (8 << 20), 32 << 20)


@functools.lru_cache(maxsize=None)
def _num_tensorcores():
    """TensorCores per chip (2 on v7x). Best-effort; 1 if undetectable."""
    try:
        d = jax.devices()[0]
        if d.platform != "tpu":
            return 1
        for attr in ("num_cores", "core_count", "num_cores_per_chip"):
            v = getattr(d, attr, None)
            if isinstance(v, int) and v > 0:
                return v
    except Exception:
        pass
    return 1


def _vmem_estimate(tm, t_ff, d_model_p, cbytes, obytes, wbufs):
    """Tiled working set: pipelined x/W/out tiles + f32 acc + fc1 intermediate."""
    return (2 * tm * d_model_p * cbytes            # x tile (double-buffered)
            + wbufs * d_model_p * t_ff * cbytes    # W1 chunks
            + wbufs * t_ff * d_model_p * cbytes    # W2 chunks
            + 2 * (t_ff + d_model_p) * 4           # bias chunks (f32)
            + 2 * tm * d_model_p * obytes          # output tile
            + tm * d_model_p * 4                   # f32 accumulator scratch
            + tm * t_ff * 4                        # relu(x@W1+b1) intermediate (f32)
            + (2 << 20))                           # MXU/DMA staging margin


def ffn_kernel(x_ref, w1_ref, b1_ref, w2_ref, b2_ref, o_ref, acc_ref):
    # x_ref:  (tm, d_model_p)       compute dtype (bf16 default)
    # w1_ref: (d_model_p, t_ff)     compute dtype
    # b1_ref: (1, t_ff)             f32
    # w2_ref: (t_ff, d_model_p)     compute dtype
    # b2_ref: (1, d_model_p)        f32
    # o_ref:  (tm, d_model_p)       output dtype
    # acc_ref:(tm, d_model_p)       f32 accumulator (resident across k)
    k = pl.program_id(1)

    @pl.when(k == 0)
    def _init():
        # Fold the fc2 bias into the accumulator init (added exactly once).
        acc_ref[...] = jnp.broadcast_to(b2_ref[...], acc_ref.shape).astype(
            jnp.float32)

    # fc1 chunk: (tm, d_model_p) @ (d_model_p, t_ff) -> f32, + b1 chunk, ReLU.
    h = jnp.dot(x_ref[...], w1_ref[...], preferred_element_type=jnp.float32)
    h = jnp.maximum(h + b1_ref[...], 0.0)

    # fc2 chunk: accumulate (tm, t_ff) @ (t_ff, d_model_p) into f32 scratch.
    acc_ref[...] += jnp.dot(h.astype(w2_ref.dtype), w2_ref[...],
                            preferred_element_type=jnp.float32)

    @pl.when(k == pl.num_programs(1) - 1)
    def _finalize():
        o_ref[...] = acc_ref[...].astype(o_ref.dtype)


class PallasPositionWiseFeedForward:
    """FFN with weight prep (pad + cast) hoisted to construction time.

    w1: [d_model, d_ff], w2: [d_ff, d_model] (transpose of PyTorch's [out, in]),
    b1: [d_ff], b2: [d_model].
    """

    def __init__(self, w1, b1, w2, b2, *, tm=1024, t_ff=1024,
                 compute_dtype=jnp.bfloat16, out_dtype=None):
        w1 = jnp.asarray(w1); b1 = jnp.asarray(b1)
        w2 = jnp.asarray(w2); b2 = jnp.asarray(b2)
        d_model, d_ff = w1.shape
        assert w2.shape == (d_ff, d_model)
        assert b1.shape == (d_ff,) and b2.shape == (d_model,)

        self.d_model, self.d_ff = d_model, d_ff
        self.compute_dtype = compute_dtype
        self.out_dtype = out_dtype

        # 256-aligned contraction/output dim fills the 256x256 MXUs (v6e/v7x);
        # negligible extra padding, harmless on v5e.
        self.d_model_p = _round_up(d_model, 256)

        # --- plan tiles against the (clamped) device VMEM budget -------------
        self.vmem_budget = _device_vmem_budget_bytes()
        cbytes = jnp.dtype(compute_dtype).itemsize
        obytes_plan = 4  # worst-case output dtype for planning
        t_ff_eff = min(t_ff, _round_up(d_ff, 128))
        tm_plan = _round_up(tm, 256) if tm >= 256 else _round_up(max(tm, 8), 8)
        # Shrink t_ff first, then tm, until the pipelined working set fits.
        while (_vmem_estimate(tm_plan, t_ff_eff, self.d_model_p, cbytes,
                              obytes_plan, 2) > self.vmem_budget
               and t_ff_eff > 256):
            t_ff_eff = max(128, _round_up(t_ff_eff // 2, 128))
        while (_vmem_estimate(tm_plan, t_ff_eff, self.d_model_p, cbytes,
                              obytes_plan, 2) > self.vmem_budget
               and tm_plan > 256):
            tm_plan = max(256, _round_up(tm_plan // 2, 256))
        self.tm_max = tm_plan
        self.t_ff = t_ff_eff
        self.d_ff_p = _round_up(d_ff, t_ff_eff)

        # --- pad + cast params ONCE (hoisted out of the per-call path).
        # Zero padding is exact: padded d_ff columns have zero weights & bias
        # -> relu(0) = 0 -> zero contribution; padded d_model cols are sliced.
        def pad2(a, rows, cols):
            if a.shape != (rows, cols):
                a = jnp.pad(a, ((0, rows - a.shape[0]), (0, cols - a.shape[1])))
            return a

        self.w1p = pad2(w1, self.d_model_p, self.d_ff_p).astype(compute_dtype)
        self.w2p = pad2(w2, self.d_ff_p, self.d_model_p).astype(compute_dtype)
        self.b1p = pad2(b1.reshape(1, d_ff), 1, self.d_ff_p).astype(jnp.float32)
        self.b2p = pad2(b2.reshape(1, d_model), 1, self.d_model_p).astype(jnp.float32)

    def __call__(self, x):
        *lead, d_model = x.shape
        assert d_model == self.d_model
        out_dtype = self.out_dtype or x.dtype
        M = int(math.prod(lead)) if lead else 1

        # Row tile: as large as planned; keep >= 2 tiles when the chip has two
        # TensorCores so the "parallel" M axis is sharded across both.
        tm_eff = min(self.tm_max, _round_up(M, 8))
        if (_num_tensorcores() > 1 and M >= 512
                and _round_up(M, tm_eff) // tm_eff < 2):
            tm_eff = max(256, _round_up(_cdiv(M, 2), 256))
        M_p = _round_up(M, tm_eff)
        k_steps = self.d_ff_p // self.t_ff

        cbytes = jnp.dtype(self.compute_dtype).itemsize
        obytes = jnp.dtype(out_dtype).itemsize
        # Small row tiles barely hide the weight DMA (v5e): deepen the weight
        # pipeline to 3 buffers when there are enough k steps and VMEM allows.
        wbufs = 3 if (tm_eff < 512 and k_steps > 2 and hasattr(pl, "Buffered")) else 2
        if (wbufs == 3 and _vmem_estimate(tm_eff, self.t_ff, self.d_model_p,
                                          cbytes, obytes, 3) > self.vmem_budget):
            wbufs = 2
        est = _vmem_estimate(tm_eff, self.t_ff, self.d_model_p, cbytes, obytes, wbufs)
        vmem_limit = int(min(self.vmem_budget, max(est, 32 << 20)))

        x2 = x.reshape(M, d_model)
        if (M_p, self.d_model_p) != (M, d_model):
            x2 = jnp.pad(x2, ((0, M_p - M), (0, self.d_model_p - d_model)))
        x2 = x2.astype(self.compute_dtype)

        if wbufs != 2:
            w1_spec = pl.BlockSpec((self.d_model_p, self.t_ff),
                                   lambda i, k: (0, k),
                                   pipeline_mode=pl.Buffered(wbufs))
            w2_spec = pl.BlockSpec((self.t_ff, self.d_model_p),
                                   lambda i, k: (k, 0),
                                   pipeline_mode=pl.Buffered(wbufs))
        else:
            w1_spec = pl.BlockSpec((self.d_model_p, self.t_ff), lambda i, k: (0, k))
            w2_spec = pl.BlockSpec((self.t_ff, self.d_model_p), lambda i, k: (k, 0))

        out = pl.pallas_call(
            ffn_kernel,
            out_shape=jax.ShapeDtypeStruct((M_p, self.d_model_p), out_dtype),
            grid_spec=pltpu.PrefetchScalarGridSpec(
                num_scalar_prefetch=0,
                grid=(M_p // tm_eff, k_steps),
                in_specs=[
                    pl.BlockSpec((tm_eff, self.d_model_p), lambda i, k: (i, 0)),
                    w1_spec,
                    pl.BlockSpec((1, self.t_ff), lambda i, k: (0, k)),
                    w2_spec,
                    pl.BlockSpec((1, self.d_model_p), lambda i, k: (0, 0)),
                ],
                out_specs=pl.BlockSpec((tm_eff, self.d_model_p),
                                       lambda i, k: (i, 0)),
                scratch_shapes=[pltpu.VMEM((tm_eff, self.d_model_p), jnp.float32)],
            ),
            compiler_params=pltpu.CompilerParams(
                dimension_semantics=("parallel", "arbitrary"),
                vmem_limit_bytes=vmem_limit),
        )(x2, self.w1p, self.b1p, self.w2p, self.b2p)

        return out[:M, :d_model].reshape(*lead, d_model)


def position_wise_feed_forward(x, w1, b1, w2, b2, **kwargs):
    """One-off functional wrapper. Prefer PallasPositionWiseFeedForward so the
    weight pad/cast is hoisted out of the per-call path."""
    return PallasPositionWiseFeedForward(w1, b1, w2, b2, **kwargs)(x)


def init_params(key, d_model, d_ff, dtype=jnp.float32):
    """Deterministic init mimicking nn.Linear (uniform +/- 1/sqrt(fan_in)).
    Weights are stored as [in, out] (transpose of PyTorch's [out, in])."""
    k1, k2, k3, k4 = jax.random.split(key, 4)
    lim1 = 1.0 / jnp.sqrt(d_model)
    lim2 = 1.0 / jnp.sqrt(d_ff)
    w1 = jax.random.uniform(k1, (d_model, d_ff), dtype, -lim1, lim1)
    b1 = jax.random.uniform(k2, (d_ff,), dtype, -lim1, lim1)
    w2 = jax.random.uniform(k3, (d_ff, d_model), dtype, -lim2, lim2)
    b2 = jax.random.uniform(k4, (d_model,), dtype, -lim2, lim2)
    return w1, b1, w2, b2


if __name__ == "__main__":
    key = jax.random.PRNGKey(0)
    kx, kp, kx2, kp2 = jax.random.split(key, 4)

    # --- small shape (module intent: [batch, seq, d_model]) -----------------
    batch, seq, d_model, d_ff = 2, 8, 32, 64
    x = jax.random.normal(kx, (batch, seq, d_model), dtype=jnp.float32)
    w1, b1, w2, b2 = init_params(kp, d_model, d_ff)
    y_ref = jnp.maximum(x @ w1 + b1, 0.0) @ w2 + b2

    # Pure f32 path: tight check against the reference.
    ffn_f32 = PallasPositionWiseFeedForward(w1, b1, w2, b2,
                                            compute_dtype=jnp.float32)
    y_f32 = jax.block_until_ready(ffn_f32(x))
    assert y_f32.shape == (batch, seq, d_model)
    assert jnp.allclose(y_f32, y_ref, atol=1e-5, rtol=1e-5)

    # Default bf16-MXU path (f32 accumulation): looser check.
    ffn_bf16 = PallasPositionWiseFeedForward(w1, b1, w2, b2)
    y_bf16 = jax.block_until_ready(ffn_bf16(x))
    assert y_bf16.shape == (batch, seq, d_model)
    assert jnp.allclose(y_bf16, y_ref, atol=3e-2, rtol=3e-2)

    # --- medium shape exercising row tiling + multi-step d_ff accumulation ---
    batch2, seq2, d_model2, d_ff2 = 4, 128, 128, 320
    x2 = jax.random.normal(kx2, (batch2, seq2, d_model2), dtype=jnp.float32)
    w1b, b1b, w2b, b2b = init_params(kp2, d_model2, d_ff2)
    y2_ref = jnp.maximum(x2 @ w1b + b1b, 0.0) @ w2b + b2b
    ffn2 = PallasPositionWiseFeedForward(w1b, b1b, w2b, b2b,
                                         t_ff=128, compute_dtype=jnp.float32)
    y2 = jax.block_until_ready(ffn2(x2))
    assert y2.shape == (batch2, seq2, d_model2)
    assert jnp.allclose(y2, y2_ref, atol=1e-3, rtol=1e-3)

    print("KERNEL_OK")
</pallas_src>

<mosaic_0001>
module attributes {stable_mosaic.version = 11 : i64} {
  func.func @ffn_kernel(%arg0: i32, %arg1: i32, %arg2: memref<16x256xf32, #tpu.memory_space<vmem>>, %arg3: memref<256x128xf32, #tpu.memory_space<vmem>>, %arg4: memref<1x128xf32, #tpu.memory_space<vmem>>, %arg5: memref<128x256xf32, #tpu.memory_space<vmem>>, %arg6: memref<1x256xf32, #tpu.memory_space<vmem>>, %arg7: memref<16x256xf32, #tpu.memory_space<vmem>>, %arg8: memref<16x256xf32, #tpu.memory_space<vmem>>) attributes {dimension_semantics = [#tpu.dimension_semantics<parallel>, #tpu.dimension_semantics<arbitrary>], iteration_bounds = array<i64: 1, 1>, scalar_prefetch = 0 : i64, scratch_operands = 1 : i64, tpu.core_type = #tpu.core_type<tc>, window_params = [{transform_indices = @transform_0, window_bounds = array<i64: 16, 256>}, {transform_indices = @transform_1, window_bounds = array<i64: 256, 128>}, {transform_indices = @transform_2, window_bounds = array<i64: 1, 128>}, {transform_indices = @transform_3, window_bounds = array<i64: 128, 256>}, {pipeline_mode = #tpu.pipeline_mode<synchronous>, transform_indices = @transform_4, window_bounds = array<i64: 1, 256>}, {transform_indices = @transform_5, window_bounds = array<i64: 16, 256>}]} {
    %c0_i32 = arith.constant 0 : i32
    %0 = arith.cmpi eq, %arg1, %c0_i32 : i32
    %1 = arith.extui %0 : i1 to i32
    %c0_i32_0 = arith.constant 0 : i32
    %2 = arith.cmpi ne, %1, %c0_i32_0 : i32
    scf.if %2 {
      %c0_16 = arith.constant 0 : index
      %c0_17 = arith.constant 0 : index
      %19 = vector.load %arg6[%c0_16, %c0_17] : memref<1x256xf32, #tpu.memory_space<vmem>>, vector<1x256xf32>
      %20 = vector.shape_cast %19 : vector<1x256xf32> to vector<1x256xf32>
      %21 = vector.broadcast %20 : vector<1x256xf32> to vector<16x256xf32>
      %c0_18 = arith.constant 0 : index
      %c0_19 = arith.constant 0 : index
      %22 = vector.load %arg8[%c0_18, %c0_19] : memref<16x256xf32, #tpu.memory_space<vmem>>, vector<16x256xf32>
      tpu.vector_store %arg8[%c0_18, %c0_19], %21 {strides = array<i32>} : memref<16x256xf32, #tpu.memory_space<vmem>>, vector<16x256xf32>,
    } else {
    }
    %c0 = arith.constant 0 : index
    %c0_1 = arith.constant 0 : index
    %3 = vector.load %arg2[%c0, %c0_1] : memref<16x256xf32, #tpu.memory_space<vmem>>, vector<16x256xf32>
    %c0_2 = arith.constant 0 : index
    %c0_3 = arith.constant 0 : index
    %4 = vector.load %arg3[%c0_2, %c0_3] : memref<256x128xf32, #tpu.memory_space<vmem>>, vector<256x128xf32>
    %cst = arith.constant dense<0.000000e+00> : vector<16x128xf32>
    %5 = tpu.matmul %3, %4, %cst {dimension_numbers = #tpu.dot_dimension_numbers<[1], [0], [0], [1], [0, 0, 1, 1], [], []>} : vector<16x256xf32>, vector<256x128xf32>, vector<16x128xf32> -> vector<16x128xf32>
    %c0_4 = arith.constant 0 : index
    %c0_5 = arith.constant 0 : index
    %6 = vector.load %arg4[%c0_4, %c0_5] : memref<1x128xf32, #tpu.memory_space<vmem>>, vector<1x128xf32>
    %7 = vector.broadcast %6 : vector<1x128xf32> to vector<16x128xf32>
    %8 = arith.addf %5, %7 : vector<16x128xf32>
    %cst_6 = arith.constant 0.000000e+00 : f32
    %9 = vector.broadcast %cst_6 : f32 to vector<16x128xf32>
    %10 = arith.maximumf %8, %9 : vector<16x128xf32>
    %c0_7 = arith.constant 0 : index
    %c0_8 = arith.constant 0 : index
    %11 = vector.load %arg8[%c0_7, %c0_8] : memref<16x256xf32, #tpu.memory_space<vmem>>, vector<16x256xf32>
    %c0_9 = arith.constant 0 : index
    %c0_10 = arith.constant 0 : index
    %12 = vector.load %arg5[%c0_9, %c0_10] : memref<128x256xf32, #tpu.memory_space<vmem>>, vector<128x256xf32>
    %cst_11 = arith.constant dense<0.000000e+00> : vector<16x256xf32>
    %13 = tpu.matmul %10, %12, %cst_11 {dimension_numbers = #tpu.dot_dimension_numbers<[1], [0], [0], [1], [0, 0, 1, 1], [], []>} : vector<16x128xf32>, vector<128x256xf32>, vector<16x256xf32> -> vector<16x256xf32>
    %14 = arith.addf %11, %13 : vector<16x256xf32>
    %c0_12 = arith.constant 0 : index
    %c0_13 = arith.constant 0 : index
    %15 = vector.load %arg8[%c0_12, %c0_13] : memref<16x256xf32, #tpu.memory_space<vmem>>, vector<16x256xf32>
    tpu.vector_store %arg8[%c0_12, %c0_13], %14 {strides = array<i32>} : memref<16x256xf32, #tpu.memory_space<vmem>>, vector<16x256xf32>,
    %c0_i32_14 = arith.constant 0 : i32
    %16 = arith.cmpi eq, %arg1, %c0_i32_14 : i32
    %17 = arith.extui %16 : i1 to i32
    %c0_i32_15 = arith.constant 0 : i32
    %18 = arith.cmpi ne, %17, %c0_i32_15 : i32
    scf.if %18 {
      %c0_16 = arith.constant 0 : index
      %c0_17 = arith.constant 0 : index
      %19 = vector.load %arg8[%c0_16, %c0_17] : memref<16x256xf32, #tpu.memory_space<vmem>>, vector<16x256xf32>
      %c0_18 = arith.constant 0 : index
      %c0_19 = arith.constant 0 : index
      %20 = vector.load %arg7[%c0_18, %c0_19] : memref<16x256xf32, #tpu.memory_space<vmem>>, vector<16x256xf32>
      tpu.vector_store %arg7[%c0_18, %c0_19], %19 {strides = array<i32>} : memref<16x256xf32, #tpu.memory_space<vmem>>, vector<16x256xf32>,
    } else {
    }
    return
  }
  func.func @transform_0(%arg0: i32, %arg1: i32) -> (i32, i32) {
    %c0_i32 = arith.constant 0 : i32
    %c0_i32_0 = arith.constant 0 : i32
    return %arg0, %c0_i32 : i32, i32
  }
  func.func @transform_1(%arg0: i32, %arg1: i32) -> (i32, i32) {
    %c0_i32 = arith.constant 0 : i32
    %c0_i32_0 = arith.constant 0 : i32
    return %c0_i32, %arg1 : i32, i32
  }
  func.func @transform_2(%arg0: i32, %arg1: i32) -> (i32, i32) {
    %c0_i32 = arith.constant 0 : i32
    %c0_i32_0 = arith.constant 0 : i32
    return %c0_i32, %arg1 : i32, i32
  }
  func.func @transform_3(%arg0: i32, %arg1: i32) -> (i32, i32) {
    %c0_i32 = arith.constant 0 : i32
    %c0_i32_0 = arith.constant 0 : i32
    return %arg1, %c0_i32 : i32, i32
  }
  func.func @transform_4(%arg0: i32, %arg1: i32) -> (i32, i32) {
    %c0_i32 = arith.constant 0 : i32
    %c0_i32_0 = arith.constant 0 : i32
    %c0_i32_1 = arith.constant 0 : i32
    return %c0_i32, %c0_i32_0 : i32, i32
  }
  func.func @transform_5(%arg0: i32, %arg1: i32) -> (i32, i32) {
    %c0_i32 = arith.constant 0 : i32
    %c0_i32_0 = arith.constant 0 : i32
    return %arg0, %c0_i32 : i32, i32
  }
}

</mosaic_0001>

<llo_original>
// kernel: tpu_custom_call.1
$region0: #{tpu_custom_call.1}
  #allocation0 [shape = 'u32[]', space=smem, size = 0x4, offset = 0x4, fixed_abs, tag = 'smem constant byte address 0x4 - core index']
  #allocation1 [shape = 'u32[144,128]{1,0:T(1,128)}', space=vmem, size = 0x12000, scoped, tag = 'internal scratch']
  #allocation2 [shape = 'f32[16,256]{1,0:T(8,128)}', space=vmem, size = 0x4000, scoped, tag = 'scratch operand']
  %s0 = inlined_call_operand.hbm [shape: f32[16,256], index: 0, kind: input, shape index: {}]
  %s1 = inlined_call_operand.hbm [shape: f32[256,128], index: 1, kind: input, shape index: {}]
  %s2 = inlined_call_operand.vmem [shape: f32[1,128], index: 2, kind: input, shape index: {}]
  %s3 = inlined_call_operand.hbm [shape: f32[128,256], index: 3, kind: input, shape index: {}]
  %s4 = inlined_call_operand.vmem [shape: f32[1,256], index: 4, kind: input, shape index: {}]
  %s5 = inlined_call_operand.hbm [shape: f32[16,256], index: 5, kind: output, shape index: {}]
  %s6 = sld [smem:[#allocation0]]
  $region50: #{tpu_custom_call.1} parent=0
    _
  %s8 = ssub.s32 1, %s6
  %s9 = scalar_select 0, %s8, %s6
  $region1: #{tpu_custom_call.1} parent=0
    #allocation3 [shape = 'u8[16384]{0}', space=vmem, size = 0x4000, scoped, tag = 'input window, operand 0, single buffered']
    #allocation4 [shape = 's32[1]{0}', space=sflag, size = 0x4, scoped, tag = 'scoped memory for tpu_custom_call.1']
    #allocation5 [shape = 's32[1]{0}', space=sflag, size = 0x4, scoped, tag = 'scoped memory for tpu_custom_call.1']
    #allocation6 [shape = 'u8[131072]{0}', space=vmem, size = 0x20000, scoped, tag = 'input window, operand 1, single buffered']
    #allocation7 [shape = 's32[1]{0}', space=sflag, size = 0x4, scoped, tag = 'scoped memory for tpu_custom_call.1']
    #allocation8 [shape = 'u8[131072]{0}', space=vmem, size = 0x20000, scoped, tag = 'input window, operand 3, single buffered']
    #allocation9 [shape = 'u8[16384]{0}', space=vmem, size = 0x4000, scoped, tag = 'output window, operand 0, single buffered']
    %10 = vsyncpa [#allocation4], 0
    %11 = vsyncpa [#allocation7], 0
    %12 = vsyncpa [#allocation5], 0
    // Predicated region
    $region2: #{tpu_custom_call.1} parent=1 // pred_check
      _
    $region3: #{tpu_custom_call.1} parent=1 // pred_check_branch
      %14 = sbr.rel (0) target = $region5
    $region4: #{tpu_custom_call.1} parent=1 // pred_region
      %s16 = ssub.s32 512, 512
      %17 = vsyncadd [#allocation4], %s16
      %s18 = sshll.u32 [#allocation3], 4
      %s19 = int_to_ptr.vmem [resolvable:$true] %s18
      %24 = dma.hbm_to_vmem [thread:$0]  %s0, 512, %s19, [#allocation4], 256, 256, 16
    $region5: #{tpu_custom_call.1} parent=1 // pred_fallthru
      _
    // Predicated region
    $region6: #{tpu_custom_call.1} parent=1 // pred_check
      _
    $region7: #{tpu_custom_call.1} parent=1 // pred_check_branch
      %26 = sbr.rel (0) target = $region9
    $region8: #{tpu_custom_call.1} parent=1 // pred_region
      %s28 = ssub.s32 4096, 4096
      %29 = vsyncadd [#allocation7], %s28
      %s30 = sshll.u32 [#allocation6], 4
      %s31 = int_to_ptr.vmem [resolvable:$true] %s30
      %36 = dma.hbm_to_vmem [thread:$0]  %s1, 4096, %s31, [#allocation7], 128, 128, 8
    $region9: #{tpu_custom_call.1} parent=1 // pred_fallthru
      _
    // Predicated region
    $region10: #{tpu_custom_call.1} parent=1 // pred_check
      _
    $region11: #{tpu_custom_call.1} parent=1 // pred_check_branch
      %38 = sbr.rel (0) target = $region13
    $region12: #{tpu_custom_call.1} parent=1 // pred_region
      _
    $region13: #{tpu_custom_call.1} parent=1 // pred_fallthru
      _
    // Predicated region
    $region14: #{tpu_custom_call.1} parent=1 // pred_check
      _
    $region15: #{tpu_custom_call.1} parent=1 // pred_check_branch
      %40 = sbr.rel (0) target = $region17
    $region16: #{tpu_custom_call.1} parent=1 // pred_region
      %s42 = ssub.s32 4096, 4096
      %43 = vsyncadd [#allocation7], %s42
      %s44 = sshll.u32 [#allocation8], 4
      %s45 = int_to_ptr.vmem [resolvable:$true] %s44
      %50 = dma.hbm_to_vmem [thread:$0]  %s3, 4096, %s45, [#allocation7], 256, 256, 16
    $region17: #{tpu_custom_call.1} parent=1 // pred_fallthru
      _
    // Predicated region
    $region18: #{tpu_custom_call.1} parent=1 // pred_check
      _
    $region19: #{tpu_custom_call.1} parent=1 // pred_check_branch
      %52 = sbr.rel (0) target = $region21
    $region20: #{tpu_custom_call.1} parent=1 // pred_region
      _
    $region21: #{tpu_custom_call.1} parent=1 // pred_fallthru
      _
    // Predicated region
    $region22: #{tpu_custom_call.1} parent=1 // pred_check
      _
    $region23: #{tpu_custom_call.1} parent=1 // pred_check_branch
      %54 = sbr.rel (0) target = $region25
    $region24: #{tpu_custom_call.1} parent=1 // pred_region
      %55 = dma.done [#allocation4], 512
    $region25: #{tpu_custom_call.1} parent=1 // pred_fallthru
      _
    // Predicated region
    $region26: #{tpu_custom_call.1} parent=1 // pred_check
      _
    $region27: #{tpu_custom_call.1} parent=1 // pred_check_branch
      %57 = sbr.rel (0) target = $region29
    $region28: #{tpu_custom_call.1} parent=1 // pred_region
      %58 = dma.done [#allocation7], 4096
    $region29: #{tpu_custom_call.1} parent=1 // pred_fallthru
      _
    // Predicated region
    $region30: #{tpu_custom_call.1} parent=1 // pred_check
      _
    $region31: #{tpu_custom_call.1} parent=1 // pred_check_branch
      %60 = sbr.rel (0) target = $region33
    $region32: #{tpu_custom_call.1} parent=1 // pred_region
      %61 = dma.done [#allocation7], 4096
    $region33: #{tpu_custom_call.1} parent=1 // pred_fallthru
      _
    %p62 = scmp.eq.s32.totalorder 0, 0
    // Predicated region
    $region34: #{tpu_custom_call.1} parent=1 // pred_check
      %p63 = pneg %p62
    $region35: #{tpu_custom_call.1} parent=1 // pred_check_branch
      %65 = sbr.rel (%p63) target = $region37
    $region36: #{tpu_custom_call.1} parent=1 // pred_region
      %v66 = vld [vmem:[%s4] sm:$0x3]
      %v68 = vlaneseq
      %v69 = vshrl.u32 %v68, 7
      %v70 = vsub.s32 0, %v69
      %v71 = vrot.slane %v66, %v70
      %v72 = vlaneseq
      %v73 = vshrl.u32 %v72, 7
      %v74 = vsub.s32 1, %v73
      %v75 = vrot.slane %v66, %v74
      %78 = vst [vmem:[#allocation2] sm:$0xff] %v71
      %79 = vst [vmem:[#allocation2 + $0x8] sm:$0xff] %v75
      %80 = vst [vmem:[#allocation2 + $0x10] sm:$0xff] %v71
      %81 = vst [vmem:[#allocation2 + $0x18] sm:$0xff] %v75
    $region37: #{tpu_custom_call.1} parent=1 // pred_fallthru
      _
    %v82 = vld [vmem:[#allocation3] sm:$0xff]
    %v83 = vld [vmem:[#allocation3 + $0x8] sm:$0xff]
    %v84 = vld [vmem:[#allocation3 + $0x10] sm:$0xff]
    %v85 = vld [vmem:[#allocation3 + $0x18] sm:$0xff]
    %v86 = vld [vmem:[#allocation6] sm:$0xff]
    %v87 = vld [vmem:[#allocation6 + $0x8] sm:$0xff]
    %v88 = vld [vmem:[#allocation6 + $0x10] sm:$0xff]
    %v89 = vld [vmem:[#allocation6 + $0x18] sm:$0xff]
    %v90 = vld [vmem:[#allocation6 + $0x20] sm:$0xff]
    %v91 = vld [vmem:[#allocation6 + $0x28] sm:$0xff]
    %v92 = vld [vmem:[#allocation6 + $0x30] sm:$0xff]
    %v93 = vld [vmem:[#allocation6 + $0x38] sm:$0xff]
    %v94 = vld [vmem:[#allocation6 + $0x40] sm:$0xff]
    %v95 = vld [vmem:[#allocation6 + $0x48] sm:$0xff]
    %v96 = vld [vmem:[#allocation6 + $0x50] sm:$0xff]
    %v97 = vld [vmem:[#allocation6 + $0x58] sm:$0xff]
    %v98 = vld [vmem:[#allocation6 + $0x60] sm:$0xff]
    %v99 = vld [vmem:[#allocation6 + $0x68] sm:$0xff]
    %v100 = vld [vmem:[#allocation6 + $0x70] sm:$0xff]
    %v101 = vld [vmem:[#allocation6 + $0x78] sm:$0xff]
    %v102 = vld [vmem:[#allocation6 + $0x80] sm:$0xff]
    %v103 = vld [vmem:[#allocation6 + $0x88] sm:$0xff]
    %v104 = vld [vmem:[#allocation6 + $0x90] sm:$0xff]
    %v105 = vld [vmem:[#allocation6 + $0x98] sm:$0xff]
    %v106 = vld [vmem:[#allocation6 + $0xa0] sm:$0xff]
    %v107 = vld [vmem:[#allocation6 + $0xa8] sm:$0xff]
    %v108 = vld [vmem:[#allocation6 + $0xb0] sm:$0xff]
    %v109 = vld [vmem:[#allocation6 + $0xb8] sm:$0xff]
    %v110 = vld [vmem:[#allocation6 + $0xc0] sm:$0xff]
    %v111 = vld [vmem:[#allocation6 + $0xc8] sm:$0xff]
    %v112 = vld [vmem:[#allocation6 + $0xd0] sm:$0xff]
    %v113 = vld [vmem:[#allocation6 + $0xd8] sm:$0xff]
    %v114 = vld [vmem:[#allocation6 + $0xe0] sm:$0xff]
    %v115 = vld [vmem:[#allocation6 + $0xe8] sm:$0xff]
    %v116 = vld [vmem:[#allocation6 + $0xf0] sm:$0xff]
    %v117 = vld [vmem:[#allocation6 + $0xf8] sm:$0xff]
    %v118 = vld [vmem:[%s2] sm:$0x1]
    %v120 = vlaneseq
    %v121 = vshrl.u32 %v120, 7
    %v122 = vsub.s32 0, %v121
    %v123 = vrot.slane %v118, %v122
    %125 = vmatprep.subr.mxu0 0.0
    %126 = vmatpush1.msra.mxu0 %v86
    %127 = vmatprep.subr.mxu0 0.0
    %128 = vmatpush1.msra.mxu0 %v87
    %129 = vmatprep.subr.mxu0 0.0
    %130 = vmatpush1.msra.mxu0 %v88
    %131 = vmatprep.subr.mxu0 0.0
    %132 = vmatpush1.msra.mxu0 %v89
    %133 = vmatprep.subr.mxu0 0.0
    %134 = vmatpush1.msra.mxu0 %v90
    %135 = vmatprep.subr.mxu0 0.0
    %136 = vmatpush1.msra.mxu0 %v91
    %137 = vmatprep.subr.mxu0 0.0
    %138 = vmatpush1.msra.mxu0 %v92
    %139 = vmatprep.subr.mxu0 0.0
    %140 = vmatpush1.msra.mxu0 %v93
    %141 = vmatprep.subr.mxu0 0.0
    %142 = vmatpush1.msra.mxu0 %v94
    %143 = vmatprep.subr.mxu0 0.0
    %144 = vmatpush1.msra.mxu0 %v95
    %145 = vmatprep.subr.mxu0 0.0
    %146 = vmatpush1.msra.mxu0 %v96
    %147 = vmatprep.subr.mxu0 0.0
    %148 = vmatpush1.msra.mxu0 %v97
    %149 = vmatprep.subr.mxu0 0.0
    %150 = vmatpush1.msra.mxu0 %v98
    %151 = vmatprep.subr.mxu0 0.0
    %152 = vmatpush1.msra.mxu0 %v99
    %153 = vmatprep.subr.mxu0 0.0
    %154 = vmatpush1.msra.mxu0 %v100
    %155 = vmatprep.subr.mxu0 0.0
    %156 = vmatpush1.msra.mxu0 %v101
    %157 = vmatprep.subr.mxu0 0.0
    %158 = vmatpush1.msra.mxu0 %v102
    %159 = vmatprep.subr.mxu0 0.0
    %160 = vmatpush1.msra.mxu0 %v103
    %161 = vmatprep.subr.mxu0 0.0
    %162 = vmatpush1.msra.mxu0 %v104
    %163 = vmatprep.subr.mxu0 0.0
    %164 = vmatpush1.msra.mxu0 %v105
    %165 = vmatprep.subr.mxu0 0.0
    %166 = vmatpush1.msra.mxu0 %v106
    %167 = vmatprep.subr.mxu0 0.0
    %168 = vmatpush1.msra.mxu0 %v107
    %169 = vmatprep.subr.mxu0 0.0
    %170 = vmatpush1.msra.mxu0 %v108
    %171 = vmatprep.subr.mxu0 0.0
    %172 = vmatpush1.msra.mxu0 %v109
    %173 = vmatprep.subr.mxu0 0.0
    %174 = vmatpush1.msra.mxu0 %v110
    %175 = vmatprep.subr.mxu0 0.0
    %176 = vmatpush1.msra.mxu0 %v111
    %177 = vmatprep.subr.mxu0 0.0
    %178 = vmatpush1.msra.mxu0 %v112
    %179 = vmatprep.subr.mxu0 0.0
    %180 = vmatpush1.msra.mxu0 %v113
    %181 = vmatprep.subr.mxu0 0.0
    %182 = vmatpush1.msra.mxu0 %v114
    %183 = vmatprep.subr.mxu0 0.0
    %184 = vmatpush1.msra.mxu0 %v115
    %185 = vmatprep.subr.mxu0 0.0
    %186 = vmatpush1.msra.mxu0 %v116
    %187 = vmatprep.subr.mxu0 0.0
    %188 = vmatpush1.msra.mxu0 %v117
    %189 = vmatprep.mubr.f32.mxu0 %v83
    %190 = vmatmul.mubr.f32.gmra.mrb[0].mxu0 %v82
    %v191 = vpop.f32.mrb[0].mxu0
    %v192 = vadd.f32 %v123, %v191
    %v193 = vpop.f32.mrb[0].mxu0
    %194 = vmatprep.mubr.f32.mxu0 %v85
    %195 = vmatmul.mubr.f32.gmra.mrb[0].mxu0 %v84
    %v196 = vpop.f32.mrb[0].mxu0
    %v197 = vadd.f32 %v123, %v196
    %v198 = vpop.f32.mrb[0].mxu0
    %199 = vdwg.mxu0
    %v200 = vmax.f32 %v192, 0.0
    %v201 = vmax.f32 %v197, 0.0
    %v202 = vld [vmem:[#allocation2] sm:$0xff]
    %v203 = vld [vmem:[#allocation2 + $0x8] sm:$0xff]
    %v204 = vld [vmem:[#allocation2 + $0x10] sm:$0xff]
    %v205 = vld [vmem:[#allocation2 + $0x18] sm:$0xff]
    %v206 = vld [vmem:[#allocation8] sm:$0xff]
    %v207 = vld [vmem:[#allocation8 + $0x8] sm:$0xff]
    %v208 = vld [vmem:[#allocation8 + $0x10] sm:$0xff]
    %v209 = vld [vmem:[#allocation8 + $0x18] sm:$0xff]
    %v210 = vld [vmem:[#allocation8 + $0x20] sm:$0xff]
    %v211 = vld [vmem:[#allocation8 + $0x28] sm:$0xff]
    %v212 = vld [vmem:[#allocation8 + $0x30] sm:$0xff]
    %v213 = vld [vmem:[#allocation8 + $0x38] sm:$0xff]
    %v214 = vld [vmem:[#allocation8 + $0x40] sm:$0xff]
    %v215 = vld [vmem:[#allocation8 + $0x48] sm:$0xff]
    %v216 = vld [vmem:[#allocation8 + $0x50] sm:$0xff]
    %v217 = vld [vmem:[#allocation8 + $0x58] sm:$0xff]
    %v218 = vld [vmem:[#allocation8 + $0x60] sm:$0xff]
    %v219 = vld [vmem:[#allocation8 + $0x68] sm:$0xff]
    %v220 = vld [vmem:[#allocation8 + $0x70] sm:$0xff]
    %v221 = vld [vmem:[#allocation8 + $0x78] sm:$0xff]
    %v222 = vld [vmem:[#allocation8 + $0x80] sm:$0xff]
    %v223 = vld [vmem:[#allocation8 + $0x88] sm:$0xff]
    %v224 = vld [vmem:[#allocation8 + $0x90] sm:$0xff]
    %v225 = vld [vmem:[#allocation8 + $0x98] sm:$0xff]
    %v226 = vld [vmem:[#allocation8 + $0xa0] sm:$0xff]
    %v227 = vld [vmem:[#allocation8 + $0xa8] sm:$0xff]
    %v228 = vld [vmem:[#allocation8 + $0xb0] sm:$0xff]
    %v229 = vld [vmem:[#allocation8 + $0xb8] sm:$0xff]
    %v230 = vld [vmem:[#allocation8 + $0xc0] sm:$0xff]
    %v231 = vld [vmem:[#allocation8 + $0xc8] sm:$0xff]
    %v232 = vld [vmem:[#allocation8 + $0xd0] sm:$0xff]
    %v233 = vld [vmem:[#allocation8 + $0xd8] sm:$0xff]
    %v234 = vld [vmem:[#allocation8 + $0xe0] sm:$0xff]
    %v235 = vld [vmem:[#allocation8 + $0xe8] sm:$0xff]
    %v236 = vld [vmem:[#allocation8 + $0xf0] sm:$0xff]
    %v237 = vld [vmem:[#allocation8 + $0xf8] sm:$0xff]
    %238 = vmatprep.subr.mxu0 %v207
    %239 = vmatpush1.msra.mxu0 %v206
    %240 = vmatprep.subr.mxu0 %v209
    %241 = vmatpush1.msra.mxu0 %v208
    %242 = vmatprep.subr.mxu0 %v211
    %243 = vmatpush1.msra.mxu0 %v210
    %244 = vmatprep.subr.mxu0 %v213
    %245 = vmatpush1.msra.mxu0 %v212
    %246 = vmatprep.subr.mxu0 %v215
    %247 = vmatpush1.msra.mxu0 %v214
    %248 = vmatprep.subr.mxu0 %v217
    %249 = vmatpush1.msra.mxu0 %v216
    %250 = vmatprep.subr.mxu0 %v219
    %251 = vmatpush1.msra.mxu0 %v218
    %252 = vmatprep.subr.mxu0 %v221
    %253 = vmatpush1.msra.mxu0 %v220
    %254 = vmatprep.subr.mxu0 %v223
    %255 = vmatpush1.msra.mxu0 %v222
    %256 = vmatprep.subr.mxu0 %v225
    %257 = vmatpush1.msra.mxu0 %v224
    %258 = vmatprep.subr.mxu0 %v227
    %259 = vmatpush1.msra.mxu0 %v226
    %260 = vmatprep.subr.mxu0 %v229
    %261 = vmatpush1.msra.mxu0 %v228
    %262 = vmatprep.subr.mxu0 %v231
    %263 = vmatpush1.msra.mxu0 %v230
    %264 = vmatprep.subr.mxu0 %v233
    %265 = vmatpush1.msra.mxu0 %v232
    %266 = vmatprep.subr.mxu0 %v235
    %267 = vmatpush1.msra.mxu0 %v234
    %268 = vmatprep.subr.mxu0 %v237
    %269 = vmatpush1.msra.mxu0 %v236
    %270 = vmatprep.subr.mxu0 0.0
    %271 = vmatpush1.msra.mxu0 0.0
    %272 = vmatprep.subr.mxu0 0.0
    %273 = vmatpush1.msra.mxu0 0.0
    %274 = vmatprep.subr.mxu0 0.0
    %275 = vmatpush1.msra.mxu0 0.0
    %276 = vmatprep.subr.mxu0 0.0
    %277 = vmatpush1.msra.mxu0 0.0
    %278 = vmatprep.subr.mxu0 0.0
    %279 = vmatpush1.msra.mxu0 0.0
    %280 = vmatprep.subr.mxu0 0.0
    %281 = vmatpush1.msra.mxu0 0.0
    %282 = vmatprep.subr.mxu0 0.0
    %283 = vmatpush1.msra.mxu0 0.0
    %284 = vmatprep.subr.mxu0 0.0
    %285 = vmatpush1.msra.mxu0 0.0
    %286 = vmatprep.subr.mxu0 0.0
    %287 = vmatpush1.msra.mxu0 0.0
    %288 = vmatprep.subr.mxu0 0.0
    %289 = vmatpush1.msra.mxu0 0.0
    %290 = vmatprep.subr.mxu0 0.0
    %291 = vmatpush1.msra.mxu0 0.0
    %292 = vmatprep.subr.mxu0 0.0
    %293 = vmatpush1.msra.mxu0 0.0
    %294 = vmatprep.subr.mxu0 0.0
    %295 = vmatpush1.msra.mxu0 0.0
    %296 = vmatprep.subr.mxu0 0.0
    %297 = vmatpush1.msra.mxu0 0.0
    %298 = vmatprep.subr.mxu0 0.0
    %299 = vmatpush1.msra.mxu0 0.0
    %300 = vmatprep.subr.mxu0 0.0
    %301 = vmatpush1.msra.mxu0 0.0
    %302 = vmatprep.mubr.f32.mxu0 0.0
    %303 = vmatmul.mubr.f32.gmra.mrb[0].mxu0 %v200
    %v304 = vpop.f32.mrb[0].mxu0
    %v305 = vadd.f32 0.0, %v304
    %v306 = vpop.f32.mrb[0].mxu0
    %v307 = vadd.f32 0.0, %v306
    %308 = vmatprep.mubr.f32.mxu0 0.0
    %309 = vmatmul.mubr.f32.gmra.mrb[0].mxu0 %v201
    %v310 = vpop.f32.mrb[0].mxu0
    %v311 = vadd.f32 0.0, %v310
    %v312 = vpop.f32.mrb[0].mxu0
    %v313 = vadd.f32 0.0, %v312
    %314 = vdwg.mxu0
    %v315 = vadd.f32 %v202, %v305
    %v316 = vadd.f32 %v203, %v307
    %v317 = vadd.f32 %v204, %v311
    %v318 = vadd.f32 %v205, %v313
    %319 = vst [vmem:[#allocation2] sm:$0xff] %v315
    %320 = vst [vmem:[#allocation2 + $0x8] sm:$0xff] %v316
    %321 = vst [vmem:[#allocation2 + $0x10] sm:$0xff] %v317
    %322 = vst [vmem:[#allocation2 + $0x18] sm:$0xff] %v318
    // Predicated region
    $region38: #{tpu_custom_call.1} parent=1 // pred_check
      %p323 = pneg %p62
    $region39: #{tpu_custom_call.1} parent=1 // pred_check_branch
      %325 = sbr.rel (%p323) target = $region41
    $region40: #{tpu_custom_call.1} parent=1 // pred_region
      %v326 = vld [vmem:[#allocation2] sm:$0xff]
      %v327 = vld [vmem:[#allocation2 + $0x8] sm:$0xff]
      %v328 = vld [vmem:[#allocation2 + $0x10] sm:$0xff]
      %v329 = vld [vmem:[#allocation2 + $0x18] sm:$0xff]
      %330 = vst [vmem:[#allocation9] sm:$0xff] %v326
      %331 = vst [vmem:[#allocation9 + $0x8] sm:$0xff] %v327
      %332 = vst [vmem:[#allocation9 + $0x10] sm:$0xff] %v328
      %333 = vst [vmem:[#allocation9 + $0x18] sm:$0xff] %v329
    $region41: #{tpu_custom_call.1} parent=1 // pred_fallthru
      _
    // Predicated region
    $region42: #{tpu_custom_call.1} parent=1 // pred_check
      _
    $region43: #{tpu_custom_call.1} parent=1 // pred_check_branch
      %335 = sbr.rel (0) target = $region45
    $region44: #{tpu_custom_call.1} parent=1 // pred_region
      %s337 = ssub.s32 512, 512
      %338 = vsyncadd [#allocation5], %s337
      %s339 = sshll.u32 [#allocation9], 4
      %s340 = int_to_ptr.vmem [resolvable:$true] %s339
      %345 = dma.vmem_to_hbm [thread:$0]  %s340, 512, %s5, [#allocation5], 256, 256, 16
    $region45: #{tpu_custom_call.1} parent=1 // pred_fallthru
      _
    // Predicated region
    $region46: #{tpu_custom_call.1} parent=1 // pred_check
      _
    $region47: #{tpu_custom_call.1} parent=1 // pred_check_branch
      %347 = sbr.rel (0) target = $region49
    $region48: #{tpu_custom_call.1} parent=1 // pred_region
      %348 = dma.done [#allocation5], 512
    $region49: #{tpu_custom_call.1} parent=1 // pred_fallthru
      _
    %349 = vsyncpa [#allocation4], 1
    %350 = vsyncpa [#allocation7], 1
    %351 = vsyncpa [#allocation5], 1

</llo_original>
